<compile_context>
chip_gen: v5e
topology: v5e:2x2
jax: 0.10.0
libtpu: 0.0.40
codegen_flags: <defaults>
</compile_context>

<pallas_src>
import functools

import jax
import jax.numpy as jnp
from jax.experimental import pallas as pl
from jax.experimental.pallas import tpu as pltpu


def _round_up(x, m):
    return (x + m - 1) // m * m


def cbow_kernel(ids_ref, emb_ref, dec_ref, out_ref, ctx_ref, *, inv_c):
    # ids_ref : VMEM (tm, C)    int32  -- context ids for this batch block
    # emb_ref : VMEM (V1p, Hp)  bf16   -- full (padded) embedding table, resident
    # dec_ref : VMEM (tn, Hp)   bf16   -- one vocab tile of the decoder weight
    # out_ref : VMEM (tm, tn)   f32    -- logits tile (tn % 128 == 0 -> lane-dense stores)
    # ctx_ref : VMEM (tm, Hp)   f32    -- mean context embedding, reused across vocab tiles
    j = pl.program_id(1)
    tm, C = ids_ref.shape
    V1p = emb_ref.shape[0]

    # ---- Stage 1 (once per batch block): one-hot gather + mean on the MXU ----
    @pl.when(j == 0)
    def _():
        v_iota = jax.lax.broadcasted_iota(jnp.int32, (tm, V1p), 1)
        counts = jnp.zeros((tm, V1p), jnp.float32)
        for c in range(C):  # C is small and static -> fully unrolled VPU compares
            counts = counts + (v_iota == ids_ref[:, c:c + 1]).astype(jnp.float32)
        counts = (counts * inv_c).astype(emb_ref.dtype)  # fold 1/C mean into the gather
        # (tm, V1p) @ (V1p, Hp) on the MXU, f32 accumulation.
        ctx_ref[...] = jnp.dot(counts, emb_ref[...],
                               preferred_element_type=jnp.float32)

    # ---- Stage 2 (every vocab tile): ctx @ dec_tile^T without a materialized transpose
    out_ref[...] = jax.lax.dot_general(
        ctx_ref[...].astype(dec_ref.dtype), dec_ref[...],
        dimension_numbers=(((1,), (1,)), ((), ())),   # contract H against H (trans_b)
        preferred_element_type=jnp.float32,
    )


def cbow_forward(ids, emb_w, dec_w, *, compute_dtype=jnp.bfloat16,
                 batch_block=128, vocab_tile=512):
    """CBOW forward: mean(Embedding(ids), axis=1) @ dec_w.T  (Linear, bias=False)."""
    B, C = ids.shape
    V1, H = emb_w.shape
    assert dec_w.shape == (V1, H)

    # Lane-dense padding: vocab and hidden -> multiples of 128, batch -> block multiple.
    V1p = _round_up(V1, 128)
    Hp = _round_up(H, 128)
    tm = min(batch_block, _round_up(B, 8))
    Bp = _round_up(B, tm)
    tn = min(vocab_tile, V1p)
    while V1p % tn != 0:          # keep tn a multiple of 128 that divides V1p
        tn -= 128

    emb_p = jnp.zeros((V1p, Hp), compute_dtype).at[:V1, :H].set(emb_w.astype(compute_dtype))
    dec_p = jnp.zeros((V1p, Hp), compute_dtype).at[:V1, :H].set(dec_w.astype(compute_dtype))
    ids_p = jnp.zeros((Bp, C), jnp.int32).at[:B, :].set(ids.astype(jnp.int32))

    grid = (Bp // tm, V1p // tn)

    out_p = pl.pallas_call(
        functools.partial(cbow_kernel, inv_c=float(1.0 / C)),
        out_shape=jax.ShapeDtypeStruct((Bp, V1p), jnp.float32),
        grid_spec=pltpu.PrefetchScalarGridSpec(
            num_scalar_prefetch=0,
            grid=grid,
            in_specs=[
                pl.BlockSpec((tm, C), lambda i, j: (i, 0)),           # ids batch block
                pl.BlockSpec(memory_space=pltpu.MemorySpace.VMEM),    # embedding table, resident
                pl.BlockSpec((tn, Hp), lambda i, j: (j, 0)),          # decoder vocab tile (pipelined)
            ],
            out_specs=pl.BlockSpec((tm, tn), lambda i, j: (i, j)),
            scratch_shapes=[pltpu.VMEM((tm, Hp), jnp.float32)],
        ),
        compiler_params=pltpu.CompilerParams(
            dimension_semantics=("parallel", "arbitrary"),
            vmem_limit_bytes=64 * 1024 * 1024,
        ),
    )(ids_p, emb_p, dec_p)

    # Strip batch / vocab padding (padded dec_w rows are zero, so no leakage anyway).
    return out_p[:B, :V1]


def kaiming_normal(key, shape):
    # torch.nn.init.kaiming_normal_ default: fan_in = shape[1], gain = sqrt(2)
    fan_in = shape[1]
    std = (2.0 / fan_in) ** 0.5
    return jax.random.normal(key, shape, dtype=jnp.float32) * std


if __name__ == "__main__":
    vocab_size = 63          # -> V+1 = 64
    hidden_size = 32
    batch = 8
    context_len = 4

    key = jax.random.PRNGKey(0)
    k_emb, k_dec, k_ids = jax.random.split(key, 3)

    emb_w = kaiming_normal(k_emb, (vocab_size + 1, hidden_size))   # nn.Embedding weight
    dec_w = kaiming_normal(k_dec, (vocab_size + 1, hidden_size))   # nn.Linear weight (out, in)
    ids = jax.random.randint(k_ids, (batch, context_len), 0, vocab_size + 1, dtype=jnp.int32)

    out = cbow_forward(ids, emb_w, dec_w)
    out = jax.block_until_ready(out)

    # Pure-JAX reference consistent with the kernel's bf16 weights (f32 math).
    emb_r = emb_w.astype(jnp.bfloat16).astype(jnp.float32)
    dec_r = dec_w.astype(jnp.bfloat16).astype(jnp.float32)
    ref = jnp.take(emb_r, ids, axis=0).mean(axis=1) @ dec_r.T

    assert out.shape == (batch, vocab_size + 1)
    assert jnp.allclose(out, ref, atol=2e-2, rtol=2e-2), float(jnp.max(jnp.abs(out - ref)))

    print("KERNEL_OK")
</pallas_src>

<mosaic_0001>
module attributes {stable_mosaic.version = 11 : i64} {
  func.func @cbow_kernel(%arg0: i32, %arg1: i32, %arg2: memref<8x4xi32, #tpu.memory_space<vmem>>, %arg3: memref<128x128xbf16, #tpu.memory_space<vmem>>, %arg4: memref<128x128xbf16, #tpu.memory_space<vmem>>, %arg5: memref<8x128xf32, #tpu.memory_space<vmem>>, %arg6: memref<8x128xf32, #tpu.memory_space<vmem>>) attributes {dimension_semantics = [#tpu.dimension_semantics<parallel>, #tpu.dimension_semantics<arbitrary>], iteration_bounds = array<i64: 1, 1>, scalar_prefetch = 0 : i64, scratch_operands = 1 : i64, tpu.core_type = #tpu.core_type<tc>, window_params = [{transform_indices = @transform_0, window_bounds = array<i64: 8, 4>}, {pipeline_mode = #tpu.pipeline_mode<synchronous>, transform_indices = @transform_1, window_bounds = array<i64: 128, 128>}, {transform_indices = @transform_2, window_bounds = array<i64: 128, 128>}, {transform_indices = @transform_3, window_bounds = array<i64: 8, 128>}]} {
    %c0_i32 = arith.constant 0 : i32
    %0 = arith.cmpi eq, %arg1, %c0_i32 : i32
    %1 = arith.extui %0 : i1 to i32
    %c0_i32_0 = arith.constant 0 : i32
    %2 = arith.cmpi ne, %1, %c0_i32_0 : i32
    scf.if %2 {
      %8 = tpu.iota {dimensions = array<i32: 1>} : vector<8x128xi32>
      %cst_6 = arith.constant 0.000000e+00 : f32
      %9 = vector.broadcast %cst_6 : f32 to vector<8x128xf32>
      %c0_7 = arith.constant 0 : index
      %c0_8 = arith.constant 0 : index
      %10 = vector.load %arg2[%c0_7, %c0_8] : memref<8x4xi32, #tpu.memory_space<vmem>>, vector<8x1xi32>
      %11 = vector.broadcast %10 : vector<8x1xi32> to vector<8x128xi32>
      %12 = arith.cmpi eq, %8, %11 : vector<8x128xi32>
      %13 = arith.extui %12 : vector<8x128xi1> to vector<8x128xi32>
      %14 = arith.sitofp %13 : vector<8x128xi32> to vector<8x128xf32>
      %15 = arith.addf %9, %14 : vector<8x128xf32>
      %c0_9 = arith.constant 0 : index
      %c1 = arith.constant 1 : index
      %16 = vector.load %arg2[%c0_9, %c1] : memref<8x4xi32, #tpu.memory_space<vmem>>, vector<8x1xi32>
      %17 = vector.broadcast %16 : vector<8x1xi32> to vector<8x128xi32>
      %18 = arith.cmpi eq, %8, %17 : vector<8x128xi32>
      %19 = arith.extui %18 : vector<8x128xi1> to vector<8x128xi32>
      %20 = arith.sitofp %19 : vector<8x128xi32> to vector<8x128xf32>
      %21 = arith.addf %15, %20 : vector<8x128xf32>
      %c0_10 = arith.constant 0 : index
      %c2 = arith.constant 2 : index
      %22 = vector.load %arg2[%c0_10, %c2] : memref<8x4xi32, #tpu.memory_space<vmem>>, vector<8x1xi32>
      %23 = vector.broadcast %22 : vector<8x1xi32> to vector<8x128xi32>
      %24 = arith.cmpi eq, %8, %23 : vector<8x128xi32>
      %25 = arith.extui %24 : vector<8x128xi1> to vector<8x128xi32>
      %26 = arith.sitofp %25 : vector<8x128xi32> to vector<8x128xf32>
      %27 = arith.addf %21, %26 : vector<8x128xf32>
      %c0_11 = arith.constant 0 : index
      %c3 = arith.constant 3 : index
      %28 = vector.load %arg2[%c0_11, %c3] : memref<8x4xi32, #tpu.memory_space<vmem>>, vector<8x1xi32>
      %29 = vector.broadcast %28 : vector<8x1xi32> to vector<8x128xi32>
      %30 = arith.cmpi eq, %8, %29 : vector<8x128xi32>
      %31 = arith.extui %30 : vector<8x128xi1> to vector<8x128xi32>
      %32 = arith.sitofp %31 : vector<8x128xi32> to vector<8x128xf32>
      %33 = arith.addf %27, %32 : vector<8x128xf32>
      %cst_12 = arith.constant 2.500000e-01 : f32
      %34 = vector.broadcast %cst_12 : f32 to vector<8x128xf32>
      %35 = arith.mulf %33, %34 : vector<8x128xf32>
      %36 = arith.truncf %35 : vector<8x128xf32> to vector<8x128xbf16>
      %c0_13 = arith.constant 0 : index
      %c0_14 = arith.constant 0 : index
      %37 = vector.load %arg3[%c0_13, %c0_14] : memref<128x128xbf16, #tpu.memory_space<vmem>>, vector<128x128xbf16>
      %cst_15 = arith.constant dense<0.000000e+00> : vector<8x128xf32>
      %38 = tpu.matmul %36, %37, %cst_15 {dimension_numbers = #tpu.dot_dimension_numbers<[1], [0], [0], [1], [0, 0, 1, 1], [], []>} : vector<8x128xbf16>, vector<128x128xbf16>, vector<8x128xf32> -> vector<8x128xf32>
      %c0_16 = arith.constant 0 : index
      %c0_17 = arith.constant 0 : index
      %39 = vector.load %arg6[%c0_16, %c0_17] : memref<8x128xf32, #tpu.memory_space<vmem>>, vector<8x128xf32>
      tpu.vector_store %arg6[%c0_16, %c0_17], %38 {strides = array<i32>} : memref<8x128xf32, #tpu.memory_space<vmem>>, vector<8x128xf32>,
    } else {
    }
    %c0 = arith.constant 0 : index
    %c0_1 = arith.constant 0 : index
    %3 = vector.load %arg6[%c0, %c0_1] : memref<8x128xf32, #tpu.memory_space<vmem>>, vector<8x128xf32>
    %4 = arith.truncf %3 : vector<8x128xf32> to vector<8x128xbf16>
    %c0_2 = arith.constant 0 : index
    %c0_3 = arith.constant 0 : index
    %5 = vector.load %arg4[%c0_2, %c0_3] : memref<128x128xbf16, #tpu.memory_space<vmem>>, vector<128x128xbf16>
    %cst = arith.constant dense<0.000000e+00> : vector<8x128xf32>
    %6 = tpu.matmul %4, %5, %cst {dimension_numbers = #tpu.dot_dimension_numbers<[1], [1], [0], [0], [0, 0, 1, 0], [], []>} : vector<8x128xbf16>, vector<128x128xbf16>, vector<8x128xf32> -> vector<8x128xf32>
    %c0_4 = arith.constant 0 : index
    %c0_5 = arith.constant 0 : index
    %7 = vector.load %arg5[%c0_4, %c0_5] : memref<8x128xf32, #tpu.memory_space<vmem>>, vector<8x128xf32>
    tpu.vector_store %arg5[%c0_4, %c0_5], %6 {strides = array<i32>} : memref<8x128xf32, #tpu.memory_space<vmem>>, vector<8x128xf32>,
    return
  }
  func.func @transform_0(%arg0: i32, %arg1: i32) -> (i32, i32) {
    %c0_i32 = arith.constant 0 : i32
    %c0_i32_0 = arith.constant 0 : i32
    return %arg0, %c0_i32 : i32, i32
  }
  func.func @transform_1(%arg0: i32, %arg1: i32) -> (i32, i32) {
    %c0_i32 = arith.constant 0 : i32
    %c0_i32_0 = arith.constant 0 : i32
    %c0_i32_1 = arith.constant 0 : i32
    return %c0_i32, %c0_i32_0 : i32, i32
  }
  func.func @transform_2(%arg0: i32, %arg1: i32) -> (i32, i32) {
    %c0_i32 = arith.constant 0 : i32
    %c0_i32_0 = arith.constant 0 : i32
    return %arg1, %c0_i32 : i32, i32
  }
  func.func @transform_3(%arg0: i32, %arg1: i32) -> (i32, i32) {
    %c0_i32 = arith.constant 0 : i32
    return %arg0, %arg1 : i32, i32
  }
}

</mosaic_0001>

<llo_original>
// kernel: tpu_custom_call.1
$region0: #{tpu_custom_call.1}
  #allocation0 [shape = 'u32[]', space=smem, size = 0x4, offset = 0x4, fixed_abs, tag = 'smem constant byte address 0x4 - core index']
  #allocation1 [shape = 'u32[72,128]{1,0:T(1,128)}', space=vmem, size = 0x9000, scoped, tag = 'internal scratch']
  #allocation2 [shape = 'f32[8,128]{1,0:T(8,128)}', space=vmem, size = 0x1000, scoped, tag = 'scratch operand']
  %s0 = inlined_call_operand.vmem [shape: s32[8,4], index: 0, kind: input, shape index: {}]
  %s1 = inlined_call_operand.hbm [shape: bf16[128,128], index: 1, kind: input, shape index: {}]
  %s2 = inlined_call_operand.hbm [shape: bf16[128,128], index: 2, kind: input, shape index: {}]
  %s3 = inlined_call_operand.hbm [shape: f32[8,128], index: 3, kind: output, shape index: {}]
  %s4 = sld [smem:[#allocation0]]
  $region34: #{tpu_custom_call.1} parent=0
    _
  %s6 = ssub.s32 1, %s4
  %s7 = scalar_select 0, %s6, %s4
  $region1: #{tpu_custom_call.1} parent=0
    #allocation3 [shape = 'u8[32768]{0}', space=vmem, size = 0x8000, scoped, tag = 'input window, operand 1, single buffered']
    #allocation4 [shape = 's32[1]{0}', space=sflag, size = 0x4, scoped, tag = 'scoped memory for tpu_custom_call.1']
    #allocation5 [shape = 's32[1]{0}', space=sflag, size = 0x4, scoped, tag = 'scoped memory for tpu_custom_call.1']
    #allocation6 [shape = 'u8[32768]{0}', space=vmem, size = 0x8000, scoped, tag = 'input window, operand 2, single buffered']
    #allocation7 [shape = 's32[1]{0}', space=sflag, size = 0x4, scoped, tag = 'scoped memory for tpu_custom_call.1']
    #allocation8 [shape = 'u8[4096]{0}', space=vmem, size = 0x1000, scoped, tag = 'output window, operand 0, single buffered']
    %8 = vsyncpa [#allocation4], 0
    %9 = vsyncpa [#allocation7], 0
    %10 = vsyncpa [#allocation5], 0
    // Predicated region
    $region2: #{tpu_custom_call.1} parent=1 // pred_check
      _
    $region3: #{tpu_custom_call.1} parent=1 // pred_check_branch
      %12 = sbr.rel (0) target = $region5
    $region4: #{tpu_custom_call.1} parent=1 // pred_region
      _
    $region5: #{tpu_custom_call.1} parent=1 // pred_fallthru
      _
    // Predicated region
    $region6: #{tpu_custom_call.1} parent=1 // pred_check
      _
    $region7: #{tpu_custom_call.1} parent=1 // pred_check_branch
      %14 = sbr.rel (0) target = $region9
    $region8: #{tpu_custom_call.1} parent=1 // pred_region
      %16 = vsyncadd [#allocation4], 0
      %s17 = sshll.u32 %s1, 4
      %s18 = int_to_ptr.hbm [resolvable:$true] %s17
      %s19 = sshll.u32 [#allocation3], 4
      %s20 = int_to_ptr.vmem [resolvable:$true] %s19
      %25 = dma.hbm_to_vmem [thread:$0]  %s18, 1024, %s20, [#allocation4], 64, 64, 4
    $region9: #{tpu_custom_call.1} parent=1 // pred_fallthru
      _
    // Predicated region
    $region10: #{tpu_custom_call.1} parent=1 // pred_check
      _
    $region11: #{tpu_custom_call.1} parent=1 // pred_check_branch
      %27 = sbr.rel (0) target = $region13
    $region12: #{tpu_custom_call.1} parent=1 // pred_region
      %29 = vsyncadd [#allocation7], 0
      %s30 = sshll.u32 %s2, 4
      %s31 = int_to_ptr.hbm [resolvable:$true] %s30
      %s32 = sshll.u32 [#allocation6], 4
      %s33 = int_to_ptr.vmem [resolvable:$true] %s32
      %38 = dma.hbm_to_vmem [thread:$0]  %s31, 1024, %s33, [#allocation7], 64, 64, 4
    $region13: #{tpu_custom_call.1} parent=1 // pred_fallthru
      _
    // Predicated region
    $region14: #{tpu_custom_call.1} parent=1 // pred_check
      _
    $region15: #{tpu_custom_call.1} parent=1 // pred_check_branch
      %40 = sbr.rel (0) target = $region17
    $region16: #{tpu_custom_call.1} parent=1 // pred_region
      %42 = dma.done [#allocation4], 1024
    $region17: #{tpu_custom_call.1} parent=1 // pred_fallthru
      _
    // Predicated region
    $region18: #{tpu_custom_call.1} parent=1 // pred_check
      _
    $region19: #{tpu_custom_call.1} parent=1 // pred_check_branch
      %44 = sbr.rel (0) target = $region21
    $region20: #{tpu_custom_call.1} parent=1 // pred_region
      %46 = dma.done [#allocation7], 1024
    $region21: #{tpu_custom_call.1} parent=1 // pred_fallthru
      _
    %p47 = scmp.eq.s32.totalorder 0, 0
    // Predicated region
    $region22: #{tpu_custom_call.1} parent=1 // pred_check
      %p48 = pneg %p47
    $region23: #{tpu_custom_call.1} parent=1 // pred_check_branch
      %50 = sbr.rel (%p48) target = $region25
    $region24: #{tpu_custom_call.1} parent=1 // pred_region
      %v51 = vlaneseq
      %v52 = vand.u32 %v51, 127
      %v53 = vld [vmem:[%s0] sm:$0xff]
      %54 = vset.pattern.permute.xlu0 0
      %55 = vperm.xlu0 %54, %v53
      %v56 = vpop.permute.xlu0 %55
      %vm57 = vcmp.eq.s32.totalorder %v52, %v56
      %v58 = vsel %vm57, 1, 0
      %v59 = vcvt.s32.f32 %v58
      %v60 = vadd.f32 %v59, 0.0
      %61 = vset.pattern.permute.xlu0 1
      %62 = vperm.xlu0 %61, %v53
      %v63 = vpop.permute.xlu0 %62
      %vm64 = vcmp.eq.s32.totalorder %v52, %v63
      %v65 = vsel %vm64, 1, 0
      %v66 = vcvt.s32.f32 %v65
      %v67 = vadd.f32 %v60, %v66
      %68 = vset.pattern.permute.xlu0 2
      %69 = vperm.xlu0 %68, %v53
      %v70 = vpop.permute.xlu0 %69
      %vm71 = vcmp.eq.s32.totalorder %v52, %v70
      %v72 = vsel %vm71, 1, 0
      %v73 = vcvt.s32.f32 %v72
      %v74 = vadd.f32 %v67, %v73
      %75 = vset.pattern.permute.xlu0 3
      %76 = vperm.xlu0 %75, %v53
      %v77 = vpop.permute.xlu0 %76
      %vm78 = vcmp.eq.s32.totalorder %v52, %v77
      %v79 = vsel %vm78, 1, 0
      %v80 = vcvt.s32.f32 %v79
      %v81 = vadd.f32 %v74, %v80
      %v82 = vmul.f32 %v81, 0.25
      %v83 = vpack.c.bf16 %v82, %v82
      %v84 = vld [vmem:[#allocation3] sm:$0xf]
      %v85 = vld [vmem:[#allocation3 + $0x4] sm:$0xf]
      %v86 = vld [vmem:[#allocation3 + $0x8] sm:$0xf]
      %v87 = vld [vmem:[#allocation3 + $0xc] sm:$0xf]
      %v88 = vld [vmem:[#allocation3 + $0x10] sm:$0xf]
      %v89 = vld [vmem:[#allocation3 + $0x14] sm:$0xf]
      %v90 = vld [vmem:[#allocation3 + $0x18] sm:$0xf]
      %v91 = vld [vmem:[#allocation3 + $0x1c] sm:$0xf]
      %v92 = vld [vmem:[#allocation3 + $0x20] sm:$0xf]
      %v93 = vld [vmem:[#allocation3 + $0x24] sm:$0xf]
      %v94 = vld [vmem:[#allocation3 + $0x28] sm:$0xf]
      %v95 = vld [vmem:[#allocation3 + $0x2c] sm:$0xf]
      %v96 = vld [vmem:[#allocation3 + $0x30] sm:$0xf]
      %v97 = vld [vmem:[#allocation3 + $0x34] sm:$0xf]
      %v98 = vld [vmem:[#allocation3 + $0x38] sm:$0xf]
      %v99 = vld [vmem:[#allocation3 + $0x3c] sm:$0xf]
      %v116 = vunpack.c.l.b16 %v84
      %v117 = vunpack.c.l.b16 %v85
      %v118 = vunpack.c.l.b16 %v86
      %v119 = vunpack.c.l.b16 %v87
      %v120 = vunpack.c.l.b16 %v88
      %v121 = vunpack.c.l.b16 %v89
      %v122 = vunpack.c.l.b16 %v90
      %v123 = vunpack.c.l.b16 %v91
      %v124 = vunpack.c.l.b16 %v92
      %v125 = vunpack.c.l.b16 %v93
      %v126 = vunpack.c.l.b16 %v94
      %v127 = vunpack.c.l.b16 %v95
      %v128 = vunpack.c.l.b16 %v96
      %v129 = vunpack.c.l.b16 %v97
      %v130 = vunpack.c.l.b16 %v98
      %v131 = vunpack.c.l.b16 %v99
      %v132 = vpack.c.b16 %v117, %v116
      %v133 = vpack.c.b16 %v119, %v118
      %v134 = vpack.c.b16 %v121, %v120
      %v135 = vpack.c.b16 %v123, %v122
      %v136 = vpack.c.b16 %v125, %v124
      %v137 = vpack.c.b16 %v127, %v126
      %v138 = vpack.c.b16 %v129, %v128
      %v139 = vpack.c.b16 %v131, %v130
      %148 = vmatpush.bf16.msra.mxu0 %v139
      %149 = vmatpush.bf16.msra.mxu0 %v138
      %150 = vmatpush.bf16.msra.mxu0 %v137
      %151 = vmatpush.bf16.msra.mxu0 %v136
      %152 = vmatpush.bf16.msra.mxu0 %v135
      %153 = vmatpush.bf16.msra.mxu0 %v134
      %154 = vmatpush.bf16.msra.mxu0 %v133
      %155 = vmatpush.bf16.msra.mxu0 %v132
      %156 = vmatmul.bf16.gmra.mxu0 %v83
      %v157 = vpop.f32.mrf.mxu0
      %v158 = vadd.f32 0.0, %v157
      %v159 = vpop.f32.mrf.mxu0
      %160 = vdwg.mxu0
      %161 = vst [vmem:[#allocation2] sm:$0xff] %v158
    $region25: #{tpu_custom_call.1} parent=1 // pred_fallthru
      _
    %v162 = vld [vmem:[#allocation2] sm:$0xff]
    %v163 = vpack.c.bf16 %v162, %v162
    %v164 = vld [vmem:[#allocation6] sm:$0xf]
    %v165 = vld [vmem:[#allocation6 + $0x4] sm:$0xf]
    %v166 = vld [vmem:[#allocation6 + $0x8] sm:$0xf]
    %v167 = vld [vmem:[#allocation6 + $0xc] sm:$0xf]
    %v168 = vld [vmem:[#allocation6 + $0x10] sm:$0xf]
    %v169 = vld [vmem:[#allocation6 + $0x14] sm:$0xf]
    %v170 = vld [vmem:[#allocation6 + $0x18] sm:$0xf]
    %v171 = vld [vmem:[#allocation6 + $0x1c] sm:$0xf]
    %v172 = vld [vmem:[#allocation6 + $0x20] sm:$0xf]
    %v173 = vld [vmem:[#allocation6 + $0x24] sm:$0xf]
    %v174 = vld [vmem:[#allocation6 + $0x28] sm:$0xf]
    %v175 = vld [vmem:[#allocation6 + $0x2c] sm:$0xf]
    %v176 = vld [vmem:[#allocation6 + $0x30] sm:$0xf]
    %v177 = vld [vmem:[#allocation6 + $0x34] sm:$0xf]
    %v178 = vld [vmem:[#allocation6 + $0x38] sm:$0xf]
    %v179 = vld [vmem:[#allocation6 + $0x3c] sm:$0xf]
    %v196 = vunpack.c.l.b16 %v164
    %v197 = vunpack.c.l.b16 %v165
    %v198 = vunpack.c.l.b16 %v166
    %v199 = vunpack.c.l.b16 %v167
    %v200 = vunpack.c.l.b16 %v168
    %v201 = vunpack.c.l.b16 %v169
    %v202 = vunpack.c.l.b16 %v170
    %v203 = vunpack.c.l.b16 %v171
    %v204 = vunpack.c.l.b16 %v172
    %v205 = vunpack.c.l.b16 %v173
    %v206 = vunpack.c.l.b16 %v174
    %v207 = vunpack.c.l.b16 %v175
    %v208 = vunpack.c.l.b16 %v176
    %v209 = vunpack.c.l.b16 %v177
    %v210 = vunpack.c.l.b16 %v178
    %v211 = vunpack.c.l.b16 %v179
    %v212 = vpack.c.b16 %v197, %v196
    %v213 = vpack.c.b16 %v199, %v198
    %v214 = vpack.c.b16 %v201, %v200
    %v215 = vpack.c.b16 %v203, %v202
    %v216 = vpack.c.b16 %v205, %v204
    %v217 = vpack.c.b16 %v207, %v206
    %v218 = vpack.c.b16 %v209, %v208
    %v219 = vpack.c.b16 %v211, %v210
    %228 = vmatpush.bf16.xpose.msra.mxu0 %v219
    %229 = vmatpush.bf16.xpose.msra.mxu0 %v218
    %230 = vmatpush.bf16.xpose.msra.mxu0 %v217
    %231 = vmatpush.bf16.xpose.msra.mxu0 %v216
    %232 = vmatpush.bf16.xpose.msra.mxu0 %v215
    %233 = vmatpush.bf16.xpose.msra.mxu0 %v214
    %234 = vmatpush.bf16.xpose.msra.mxu0 %v213
    %235 = vmatpush.bf16.xpose.msra.mxu0 %v212
    %236 = vmatmul.bf16.gmra.mxu0 %v163
    %v237 = vpop.f32.mrf.mxu0
    %v238 = vadd.f32 0.0, %v237
    %v239 = vpop.f32.mrf.mxu0
    %240 = vdwg.mxu0
    %241 = vst [vmem:[#allocation8] sm:$0xff] %v238
    // Predicated region
    $region26: #{tpu_custom_call.1} parent=1 // pred_check
      _
    $region27: #{tpu_custom_call.1} parent=1 // pred_check_branch
      %243 = sbr.rel (0) target = $region29
    $region28: #{tpu_custom_call.1} parent=1 // pred_region
      %245 = vsyncadd [#allocation5], 0
      %s247 = sshll.u32 [#allocation8], 4
      %s248 = int_to_ptr.vmem [resolvable:$true] %s247
      %s249 = sshll.u32 %s3, 4
      %s250 = int_to_ptr.hbm [resolvable:$true] %s249
      %252 = dma.vmem_to_hbm [thread:$0]  %s248, 128, %s250, [#allocation5]
    $region29: #{tpu_custom_call.1} parent=1 // pred_fallthru
      _
    // Predicated region
    $region30: #{tpu_custom_call.1} parent=1 // pred_check
      _
    $region31: #{tpu_custom_call.1} parent=1 // pred_check_branch
      %254 = sbr.rel (0) target = $region33
    $region32: #{tpu_custom_call.1} parent=1 // pred_region
      %256 = dma.done [#allocation5], 128
    $region33: #{tpu_custom_call.1} parent=1 // pred_fallthru
      _
    %257 = vsyncpa [#allocation4], 1
    %258 = vsyncpa [#allocation7], 1
    %259 = vsyncpa [#allocation5], 1

</llo_original>
